<compile_context>
chip_gen: v5e
topology: v5e:2x2
jax: 0.10.0
libtpu: 0.0.40
codegen_flags: <defaults>
</compile_context>

<pallas_src>
import jax
import jax.numpy as jnp
from jax.experimental import pallas as pl
from jax.experimental.pallas import tpu as pltpu

LANE = 128     # f32 lane width
SUBLANE = 8    # f32 sublane width


def _round_up(x, m):
    return ((x + m - 1) // m) * m


def _mlp_kernel(x_ref, w1_ref, b1_ref, w2_ref, b2_ref, w3_ref, b3_ref, o_ref):
    x = x_ref[...].astype(jnp.float32)                        # (B_BLK, 1)

    # Layer 1: Linear(1, Mp) + ReLU.  K=1 contraction == outer product -> VPU
    # broadcast mul/add in f32; keeps the degenerate matmul off the MXU.
    h1 = jnp.maximum(x * w1_ref[...] + b1_ref[...], 0.0)      # (B_BLK, Mp) f32

    # Layer 2: Linear(Mp, Mp) + ReLU.  MXU with bf16 (or f32) operands, f32 acc.
    w2 = w2_ref[...]
    h2 = jnp.dot(h1.astype(w2.dtype), w2,
                 preferred_element_type=jnp.float32) + b2_ref[...]
    h2 = jnp.maximum(h2, 0.0)

    # Layer 3: Linear(Mp, Mp) + Sigmoid.  exp and reciprocal both map to the EUP
    # slot; approx reciprocal avoids the VPU filler of jax.nn.sigmoid's stable form.
    w3 = w3_ref[...]
    h3 = jnp.dot(h2.astype(w3.dtype), w3,
                 preferred_element_type=jnp.float32) + b3_ref[...]
    sig = pl.reciprocal(1.0 + jnp.exp(-h3), approx=True)
    o_ref[...] = sig.astype(o_ref.dtype)


def adaptive_modulator(snr, params, *, block_b=2048,
                       mxu_dtype=jnp.bfloat16,
                       out_dtype=jnp.float32,
                       core_parallel=False):
    """snr: (B, 1) float32; params: dict of w1,b1,w2,b2,w3,b3 (w: (in,out), b: (1,out)).
    Returns (B, M) array of `out_dtype` (default float32).

    mxu_dtype:   dtype of the layer-2/3 weight operands fed to the MXU
                 (bf16 default: native MXU path with f32 accumulation).
    out_dtype:   set to jnp.bfloat16 if downstream tolerates it (halves the
                 HBM-write bytes on the mem-bound path).
    core_parallel: set True on v7x to shard grid steps across its 2 TensorCores.
    """
    B = snr.shape[0]
    M = params["w1"].shape[1]

    # ---- lane-dense feature padding (exactness preserved) ----
    Mp = _round_up(max(M, LANE), LANE)

    def pad2(a, rows, cols):
        a = a.astype(jnp.float32)
        return jnp.pad(a, ((0, rows - a.shape[0]), (0, cols - a.shape[1])))

    w1 = pad2(params["w1"], 1, Mp)
    b1 = pad2(params["b1"], 1, Mp)
    w2 = pad2(params["w2"], Mp, Mp).astype(mxu_dtype)
    b2 = pad2(params["b2"], 1, Mp)
    w3 = pad2(params["w3"], Mp, Mp).astype(mxu_dtype)
    b3 = pad2(params["b3"], 1, Mp)

    # ---- batch tiling: pad B up to a multiple of the block (multiple of 8) ----
    b_blk = _round_up(min(block_b, _round_up(B, SUBLANE)), SUBLANE)
    Bp = _round_up(B, b_blk)
    snr_p = jnp.pad(snr.astype(jnp.float32), ((0, Bp - B), (0, 0)))

    grid = (Bp // b_blk,)

    # Weights/biases stay resident across all grid steps (constant index_map).
    # Once they become VMEM-significant (large M), request single-buffering so the
    # never-refetched blocks don't pay for a pointless second buffer; at Mp=128 the
    # saving is negligible so the default (2-buffer) path is kept.
    single_buffer_weights = Mp >= 512

    def resident(shape):
        if single_buffer_weights:
            return pl.BlockSpec(shape, lambda i: (0, 0), pipeline_mode=pl.Buffered(1))
        return pl.BlockSpec(shape, lambda i: (0, 0))

    mxu_itemsize = jnp.dtype(mxu_dtype).itemsize
    out_itemsize = jnp.dtype(out_dtype).itemsize

    # VMEM budget per step (sized explicitly so the kernel stays inside v7x's
    # 64 MiB physical VMEM even for larger M / block_b):
    vmem_bytes = (
        2 * b_blk * LANE * 4                  # snr tiles (lane-padded), double-buffered
        + 2 * b_blk * Mp * out_itemsize       # output tiles, double-buffered
        + 2 * 2 * Mp * Mp * mxu_itemsize      # w2, w3 (<= 2 buffers each)
        + 8 * 4 * Mp * 4                      # w1/b1/b2/b3 (sublane + buffer padded)
        + 6 * b_blk * Mp * 4                  # h1/h2/h3 f32 intermediates (generous)
        + (4 << 20)                           # compiler scratch headroom
    )
    vmem_limit = int(min(max(vmem_bytes, 32 << 20), 64 << 20))

    dim_sem = (pltpu.CORE_PARALLEL if core_parallel else "parallel",)

    cost = pl.CostEstimate(
        flops=2 * Bp * Mp * (1 + 2 * Mp),
        transcendentals=2 * Bp * Mp,                 # exp + reciprocal (EUP)
        bytes_accessed=(Bp * 4 + Bp * Mp * out_itemsize
                        + 2 * Mp * Mp * mxu_itemsize + 4 * Mp * 4),
    )

    out_p = pl.pallas_call(
        _mlp_kernel,
        out_shape=jax.ShapeDtypeStruct((Bp, Mp), out_dtype),
        grid=grid,
        in_specs=[
            pl.BlockSpec((b_blk, 1), lambda i: (i, 0)),   # snr tile
            resident((1, Mp)),                            # w1
            resident((1, Mp)),                            # b1
            resident((Mp, Mp)),                           # w2
            resident((1, Mp)),                            # b2
            resident((Mp, Mp)),                           # w3
            resident((1, Mp)),                            # b3
        ],
        out_specs=pl.BlockSpec((b_blk, Mp), lambda i: (i, 0)),
        compiler_params=pltpu.CompilerParams(
            dimension_semantics=dim_sem,
            vmem_limit_bytes=vmem_limit,
        ),
        cost_estimate=cost,
    )(snr_p, w1, b1, w2, b2, w3, b3)

    return out_p[:B, :M]


def init_params(key, M):
    """Deterministic init mimicking torch's default Linear init (uniform +/- 1/sqrt(fan_in))."""
    ks = jax.random.split(key, 6)

    def lin(kw, kb, fan_in, fan_out):
        bound = 1.0 / jnp.sqrt(float(fan_in))
        w = jax.random.uniform(kw, (fan_in, fan_out), jnp.float32, -bound, bound)
        b = jax.random.uniform(kb, (1, fan_out), jnp.float32, -bound, bound)
        return w, b

    w1, b1 = lin(ks[0], ks[1], 1, M)
    w2, b2 = lin(ks[2], ks[3], M, M)
    w3, b3 = lin(ks[4], ks[5], M, M)
    return {"w1": w1, "b1": b1, "w2": w2, "b2": b2, "w3": w3, "b3": b3}


def reference(snr, p):
    h1 = jnp.maximum(snr @ p["w1"] + p["b1"], 0.0)
    h2 = jnp.maximum(h1 @ p["w2"] + p["b2"], 0.0)
    return jax.nn.sigmoid(h2 @ p["w3"] + p["b3"])


if __name__ == "__main__":
    key = jax.random.PRNGKey(0)
    k_snr, k_param, k_snr2 = jax.random.split(key, 3)

    # Small case matching the module's forward (batch of SNR scalars, hidden M).
    B, M = 8, 32
    snr = jax.random.uniform(k_snr, (B, 1), jnp.float32, 0.0, 20.0)
    params = init_params(k_param, M)
    ref = reference(snr, params)

    # Default path: bf16 MXU operands, f32 accumulate/output.
    out = jax.block_until_ready(adaptive_modulator(snr, params))
    assert out.shape == (B, M), out.shape
    assert jnp.allclose(out, ref, atol=5e-2), "mismatch vs reference (bf16-MXU path)"

    # f32-weight path (tighter numerical check of structure/padding; approx
    # reciprocal contributes ~1e-4).
    out_f32 = jax.block_until_ready(
        adaptive_modulator(snr, params, mxu_dtype=jnp.float32))
    assert jnp.allclose(out_f32, ref, atol=5e-3), "mismatch vs reference (f32 path)"

    # Exercise multi-step grid + non-multiple batch padding path.
    B2 = 300
    snr2 = jax.random.uniform(k_snr2, (B2, 1), jnp.float32, 0.0, 20.0)
    out2 = jax.block_until_ready(adaptive_modulator(snr2, params, block_b=128))
    ref2 = reference(snr2, params)
    assert out2.shape == (B2, M), out2.shape
    assert jnp.allclose(out2, ref2, atol=5e-2), "mismatch vs reference (B=300)"

    print("KERNEL_OK")
</pallas_src>

<mosaic_0001>
module attributes {stable_mosaic.version = 11 : i64} {
  func.func @_mlp_kernel(%arg0: i32, %arg1: memref<8x1xf32, #tpu.memory_space<vmem>>, %arg2: memref<1x128xf32, #tpu.memory_space<vmem>>, %arg3: memref<1x128xf32, #tpu.memory_space<vmem>>, %arg4: memref<128x128xbf16, #tpu.memory_space<vmem>>, %arg5: memref<1x128xf32, #tpu.memory_space<vmem>>, %arg6: memref<128x128xbf16, #tpu.memory_space<vmem>>, %arg7: memref<1x128xf32, #tpu.memory_space<vmem>>, %arg8: memref<8x128xf32, #tpu.memory_space<vmem>>) attributes {dimension_semantics = [#tpu.dimension_semantics<parallel>], iteration_bounds = array<i64: 1>, scalar_prefetch = 0 : i64, scratch_operands = 0 : i64, tpu.core_type = #tpu.core_type<tc>, window_params = [{transform_indices = @transform_0, window_bounds = array<i64: 8, 1>}, {pipeline_mode = #tpu.pipeline_mode<synchronous>, transform_indices = @transform_1, window_bounds = array<i64: 1, 128>}, {pipeline_mode = #tpu.pipeline_mode<synchronous>, transform_indices = @transform_2, window_bounds = array<i64: 1, 128>}, {pipeline_mode = #tpu.pipeline_mode<synchronous>, transform_indices = @transform_3, window_bounds = array<i64: 128, 128>}, {pipeline_mode = #tpu.pipeline_mode<synchronous>, transform_indices = @transform_4, window_bounds = array<i64: 1, 128>}, {pipeline_mode = #tpu.pipeline_mode<synchronous>, transform_indices = @transform_5, window_bounds = array<i64: 128, 128>}, {pipeline_mode = #tpu.pipeline_mode<synchronous>, transform_indices = @transform_6, window_bounds = array<i64: 1, 128>}, {transform_indices = @transform_7, window_bounds = array<i64: 8, 128>}]} {
    %c0 = arith.constant 0 : index
    %c0_0 = arith.constant 0 : index
    %0 = vector.load %arg1[%c0, %c0_0] : memref<8x1xf32, #tpu.memory_space<vmem>>, vector<8x1xf32>
    %c0_1 = arith.constant 0 : index
    %c0_2 = arith.constant 0 : index
    %1 = vector.load %arg2[%c0_1, %c0_2] : memref<1x128xf32, #tpu.memory_space<vmem>>, vector<1x128xf32>
    %2 = vector.broadcast %0 : vector<8x1xf32> to vector<8x128xf32>
    %3 = vector.broadcast %1 : vector<1x128xf32> to vector<8x128xf32>
    %4 = arith.mulf %2, %3 : vector<8x128xf32>
    %c0_3 = arith.constant 0 : index
    %c0_4 = arith.constant 0 : index
    %5 = vector.load %arg3[%c0_3, %c0_4] : memref<1x128xf32, #tpu.memory_space<vmem>>, vector<1x128xf32>
    %6 = vector.broadcast %5 : vector<1x128xf32> to vector<8x128xf32>
    %7 = arith.addf %4, %6 : vector<8x128xf32>
    %cst = arith.constant 0.000000e+00 : f32
    %8 = vector.broadcast %cst : f32 to vector<8x128xf32>
    %9 = arith.maximumf %7, %8 : vector<8x128xf32>
    %c0_5 = arith.constant 0 : index
    %c0_6 = arith.constant 0 : index
    %10 = vector.load %arg4[%c0_5, %c0_6] : memref<128x128xbf16, #tpu.memory_space<vmem>>, vector<128x128xbf16>
    %11 = arith.truncf %9 : vector<8x128xf32> to vector<8x128xbf16>
    %cst_7 = arith.constant dense<0.000000e+00> : vector<8x128xf32>
    %12 = tpu.matmul %11, %10, %cst_7 {dimension_numbers = #tpu.dot_dimension_numbers<[1], [0], [0], [1], [0, 0, 1, 1], [], []>} : vector<8x128xbf16>, vector<128x128xbf16>, vector<8x128xf32> -> vector<8x128xf32>
    %c0_8 = arith.constant 0 : index
    %c0_9 = arith.constant 0 : index
    %13 = vector.load %arg5[%c0_8, %c0_9] : memref<1x128xf32, #tpu.memory_space<vmem>>, vector<1x128xf32>
    %14 = vector.broadcast %13 : vector<1x128xf32> to vector<8x128xf32>
    %15 = arith.addf %12, %14 : vector<8x128xf32>
    %cst_10 = arith.constant 0.000000e+00 : f32
    %16 = vector.broadcast %cst_10 : f32 to vector<8x128xf32>
    %17 = arith.maximumf %15, %16 : vector<8x128xf32>
    %c0_11 = arith.constant 0 : index
    %c0_12 = arith.constant 0 : index
    %18 = vector.load %arg6[%c0_11, %c0_12] : memref<128x128xbf16, #tpu.memory_space<vmem>>, vector<128x128xbf16>
    %19 = arith.truncf %17 : vector<8x128xf32> to vector<8x128xbf16>
    %cst_13 = arith.constant dense<0.000000e+00> : vector<8x128xf32>
    %20 = tpu.matmul %19, %18, %cst_13 {dimension_numbers = #tpu.dot_dimension_numbers<[1], [0], [0], [1], [0, 0, 1, 1], [], []>} : vector<8x128xbf16>, vector<128x128xbf16>, vector<8x128xf32> -> vector<8x128xf32>
    %c0_14 = arith.constant 0 : index
    %c0_15 = arith.constant 0 : index
    %21 = vector.load %arg7[%c0_14, %c0_15] : memref<1x128xf32, #tpu.memory_space<vmem>>, vector<1x128xf32>
    %22 = vector.broadcast %21 : vector<1x128xf32> to vector<8x128xf32>
    %23 = arith.addf %20, %22 : vector<8x128xf32>
    %cst_16 = arith.constant 0.000000e+00 : f32
    %24 = vector.broadcast %cst_16 : f32 to vector<8x128xf32>
    %25 = arith.subf %24, %23 : vector<8x128xf32>
    %26 = math.exp %25 : vector<8x128xf32>
    %cst_17 = arith.constant 1.000000e+00 : f32
    %27 = vector.broadcast %cst_17 : f32 to vector<8x128xf32>
    %28 = arith.addf %27, %26 : vector<8x128xf32>
    %29 = tpu.reciprocal %28 {approx = true} : vector<8x128xf32> -> vector<8x128xf32>
    %c0_18 = arith.constant 0 : index
    %c0_19 = arith.constant 0 : index
    %30 = vector.load %arg8[%c0_18, %c0_19] : memref<8x128xf32, #tpu.memory_space<vmem>>, vector<8x128xf32>
    tpu.vector_store %arg8[%c0_18, %c0_19], %29 {strides = array<i32>} : memref<8x128xf32, #tpu.memory_space<vmem>>, vector<8x128xf32>,
    return
  }
  func.func @transform_0(%arg0: i32) -> (i32, i32) {
    %c0_i32 = arith.constant 0 : i32
    %c0_i32_0 = arith.constant 0 : i32
    return %arg0, %c0_i32 : i32, i32
  }
  func.func @transform_1(%arg0: i32) -> (i32, i32) {
    %c0_i32 = arith.constant 0 : i32
    %c0_i32_0 = arith.constant 0 : i32
    %c0_i32_1 = arith.constant 0 : i32
    return %c0_i32, %c0_i32_0 : i32, i32
  }
  func.func @transform_2(%arg0: i32) -> (i32, i32) {
    %c0_i32 = arith.constant 0 : i32
    %c0_i32_0 = arith.constant 0 : i32
    %c0_i32_1 = arith.constant 0 : i32
    return %c0_i32, %c0_i32_0 : i32, i32
  }
  func.func @transform_3(%arg0: i32) -> (i32, i32) {
    %c0_i32 = arith.constant 0 : i32
    %c0_i32_0 = arith.constant 0 : i32
    %c0_i32_1 = arith.constant 0 : i32
    return %c0_i32, %c0_i32_0 : i32, i32
  }
  func.func @transform_4(%arg0: i32) -> (i32, i32) {
    %c0_i32 = arith.constant 0 : i32
    %c0_i32_0 = arith.constant 0 : i32
    %c0_i32_1 = arith.constant 0 : i32
    return %c0_i32, %c0_i32_0 : i32, i32
  }
  func.func @transform_5(%arg0: i32) -> (i32, i32) {
    %c0_i32 = arith.constant 0 : i32
    %c0_i32_0 = arith.constant 0 : i32
    %c0_i32_1 = arith.constant 0 : i32
    return %c0_i32, %c0_i32_0 : i32, i32
  }
  func.func @transform_6(%arg0: i32) -> (i32, i32) {
    %c0_i32 = arith.constant 0 : i32
    %c0_i32_0 = arith.constant 0 : i32
    %c0_i32_1 = arith.constant 0 : i32
    return %c0_i32, %c0_i32_0 : i32, i32
  }
  func.func @transform_7(%arg0: i32) -> (i32, i32) {
    %c0_i32 = arith.constant 0 : i32
    %c0_i32_0 = arith.constant 0 : i32
    return %arg0, %c0_i32 : i32, i32
  }
}

</mosaic_0001>

<llo_original>
// kernel: tpu_custom_call.1
$region0: #{tpu_custom_call.1}
  #allocation0 [shape = 'u32[]', space=smem, size = 0x4, offset = 0x4, fixed_abs, tag = 'smem constant byte address 0x4 - core index']
  #allocation1 [shape = 'u32[72,128]{1,0:T(1,128)}', space=vmem, size = 0x9000, scoped, tag = 'internal scratch']
  %s0 = inlined_call_operand.vmem [shape: f32[8,1], index: 0, kind: input, shape index: {}]
  %s1 = inlined_call_operand.vmem [shape: f32[1,128], index: 1, kind: input, shape index: {}]
  %s2 = inlined_call_operand.vmem [shape: f32[1,128], index: 2, kind: input, shape index: {}]
  %s3 = inlined_call_operand.hbm [shape: bf16[128,128], index: 3, kind: input, shape index: {}]
  %s4 = inlined_call_operand.vmem [shape: f32[1,128], index: 4, kind: input, shape index: {}]
  %s5 = inlined_call_operand.hbm [shape: bf16[128,128], index: 5, kind: input, shape index: {}]
  %s6 = inlined_call_operand.vmem [shape: f32[1,128], index: 6, kind: input, shape index: {}]
  %s7 = inlined_call_operand.hbm [shape: f32[8,128], index: 7, kind: output, shape index: {}]
  %s8 = sld [smem:[#allocation0]]
  $region46: #{tpu_custom_call.1} parent=0
    _
  %s10 = ssub.s32 1, %s8
  %s11 = scalar_select 0, %s10, %s8
  $region1: #{tpu_custom_call.1} parent=0
    #allocation2 [shape = 'u8[32768]{0}', space=vmem, size = 0x8000, scoped, tag = 'input window, operand 3, single buffered']
    #allocation3 [shape = 's32[1]{0}', space=sflag, size = 0x4, scoped, tag = 'scoped memory for tpu_custom_call.1']
    #allocation4 [shape = 's32[1]{0}', space=sflag, size = 0x4, scoped, tag = 'scoped memory for tpu_custom_call.1']
    #allocation5 [shape = 'u8[32768]{0}', space=vmem, size = 0x8000, scoped, tag = 'input window, operand 5, single buffered']
    #allocation6 [shape = 's32[1]{0}', space=sflag, size = 0x4, scoped, tag = 'scoped memory for tpu_custom_call.1']
    #allocation7 [shape = 'u8[4096]{0}', space=vmem, size = 0x1000, scoped, tag = 'output window, operand 0, single buffered']
    %12 = vsyncpa [#allocation3], 0
    %13 = vsyncpa [#allocation6], 0
    %14 = vsyncpa [#allocation4], 0
    // Predicated region
    $region2: #{tpu_custom_call.1} parent=1 // pred_check
      _
    $region3: #{tpu_custom_call.1} parent=1 // pred_check_branch
      %16 = sbr.rel (0) target = $region5
    $region4: #{tpu_custom_call.1} parent=1 // pred_region
      _
    $region5: #{tpu_custom_call.1} parent=1 // pred_fallthru
      _
    // Predicated region
    $region6: #{tpu_custom_call.1} parent=1 // pred_check
      _
    $region7: #{tpu_custom_call.1} parent=1 // pred_check_branch
      %18 = sbr.rel (0) target = $region9
    $region8: #{tpu_custom_call.1} parent=1 // pred_region
      _
    $region9: #{tpu_custom_call.1} parent=1 // pred_fallthru
      _
    // Predicated region
    $region10: #{tpu_custom_call.1} parent=1 // pred_check
      _
    $region11: #{tpu_custom_call.1} parent=1 // pred_check_branch
      %20 = sbr.rel (0) target = $region13
    $region12: #{tpu_custom_call.1} parent=1 // pred_region
      _
    $region13: #{tpu_custom_call.1} parent=1 // pred_fallthru
      _
    // Predicated region
    $region14: #{tpu_custom_call.1} parent=1 // pred_check
      _
    $region15: #{tpu_custom_call.1} parent=1 // pred_check_branch
      %22 = sbr.rel (0) target = $region17
    $region16: #{tpu_custom_call.1} parent=1 // pred_region
      %24 = vsyncadd [#allocation3], 0
      %s25 = sshll.u32 %s3, 4
      %s26 = int_to_ptr.hbm [resolvable:$true] %s25
      %s27 = sshll.u32 [#allocation2], 4
      %s28 = int_to_ptr.vmem [resolvable:$true] %s27
      %33 = dma.hbm_to_vmem [thread:$0]  %s26, 1024, %s28, [#allocation3], 64, 64, 4
    $region17: #{tpu_custom_call.1} parent=1 // pred_fallthru
      _
    // Predicated region
    $region18: #{tpu_custom_call.1} parent=1 // pred_check
      _
    $region19: #{tpu_custom_call.1} parent=1 // pred_check_branch
      %35 = sbr.rel (0) target = $region21
    $region20: #{tpu_custom_call.1} parent=1 // pred_region
      _
    $region21: #{tpu_custom_call.1} parent=1 // pred_fallthru
      _
    // Predicated region
    $region22: #{tpu_custom_call.1} parent=1 // pred_check
      _
    $region23: #{tpu_custom_call.1} parent=1 // pred_check_branch
      %37 = sbr.rel (0) target = $region25
    $region24: #{tpu_custom_call.1} parent=1 // pred_region
      %39 = vsyncadd [#allocation6], 0
      %s40 = sshll.u32 %s5, 4
      %s41 = int_to_ptr.hbm [resolvable:$true] %s40
      %s42 = sshll.u32 [#allocation5], 4
      %s43 = int_to_ptr.vmem [resolvable:$true] %s42
      %48 = dma.hbm_to_vmem [thread:$0]  %s41, 1024, %s43, [#allocation6], 64, 64, 4
    $region25: #{tpu_custom_call.1} parent=1 // pred_fallthru
      _
    // Predicated region
    $region26: #{tpu_custom_call.1} parent=1 // pred_check
      _
    $region27: #{tpu_custom_call.1} parent=1 // pred_check_branch
      %50 = sbr.rel (0) target = $region29
    $region28: #{tpu_custom_call.1} parent=1 // pred_region
      _
    $region29: #{tpu_custom_call.1} parent=1 // pred_fallthru
      _
    // Predicated region
    $region30: #{tpu_custom_call.1} parent=1 // pred_check
      _
    $region31: #{tpu_custom_call.1} parent=1 // pred_check_branch
      %52 = sbr.rel (0) target = $region33
    $region32: #{tpu_custom_call.1} parent=1 // pred_region
      %54 = dma.done [#allocation3], 1024
    $region33: #{tpu_custom_call.1} parent=1 // pred_fallthru
      _
    // Predicated region
    $region34: #{tpu_custom_call.1} parent=1 // pred_check
      _
    $region35: #{tpu_custom_call.1} parent=1 // pred_check_branch
      %56 = sbr.rel (0) target = $region37
    $region36: #{tpu_custom_call.1} parent=1 // pred_region
      %58 = dma.done [#allocation6], 1024
    $region37: #{tpu_custom_call.1} parent=1 // pred_fallthru
      _
    %v59 = vld [vmem:[%s0] sm:$0xff]
    %v60 = vld [vmem:[%s1] sm:$0x1]
    %62 = vset.pattern.permute.xlu0 0
    %63 = vperm.xlu0 %62, %v59
    %v64 = vpop.permute.xlu0 %63
    %v67 = vperm.slane %v60, 0
    %v69 = vmul.f32 %v64, %v67
    %v70 = vld [vmem:[%s2] sm:$0x1]
    %v72 = vperm.slane %v70, 0
    %v74 = vadd.f32 %v69, %v72
    %v75 = vmax.f32 %v74, 0.0
    %v76 = vld [vmem:[#allocation2] sm:$0xf]
    %v77 = vld [vmem:[#allocation2 + $0x4] sm:$0xf]
    %v78 = vld [vmem:[#allocation2 + $0x8] sm:$0xf]
    %v79 = vld [vmem:[#allocation2 + $0xc] sm:$0xf]
    %v80 = vld [vmem:[#allocation2 + $0x10] sm:$0xf]
    %v81 = vld [vmem:[#allocation2 + $0x14] sm:$0xf]
    %v82 = vld [vmem:[#allocation2 + $0x18] sm:$0xf]
    %v83 = vld [vmem:[#allocation2 + $0x1c] sm:$0xf]
    %v84 = vld [vmem:[#allocation2 + $0x20] sm:$0xf]
    %v85 = vld [vmem:[#allocation2 + $0x24] sm:$0xf]
    %v86 = vld [vmem:[#allocation2 + $0x28] sm:$0xf]
    %v87 = vld [vmem:[#allocation2 + $0x2c] sm:$0xf]
    %v88 = vld [vmem:[#allocation2 + $0x30] sm:$0xf]
    %v89 = vld [vmem:[#allocation2 + $0x34] sm:$0xf]
    %v90 = vld [vmem:[#allocation2 + $0x38] sm:$0xf]
    %v91 = vld [vmem:[#allocation2 + $0x3c] sm:$0xf]
    %v92 = vpack.c.bf16 %v75, %v75
    %v93 = vld [vmem:[%s4] sm:$0x1]
    %v95 = vperm.slane %v93, 0
    %v113 = vunpack.c.l.b16 %v76
    %v114 = vunpack.c.l.b16 %v77
    %v115 = vunpack.c.l.b16 %v78
    %v116 = vunpack.c.l.b16 %v79
    %v117 = vunpack.c.l.b16 %v80
    %v118 = vunpack.c.l.b16 %v81
    %v119 = vunpack.c.l.b16 %v82
    %v120 = vunpack.c.l.b16 %v83
    %v121 = vunpack.c.l.b16 %v84
    %v122 = vunpack.c.l.b16 %v85
    %v123 = vunpack.c.l.b16 %v86
    %v124 = vunpack.c.l.b16 %v87
    %v125 = vunpack.c.l.b16 %v88
    %v126 = vunpack.c.l.b16 %v89
    %v127 = vunpack.c.l.b16 %v90
    %v128 = vunpack.c.l.b16 %v91
    %v129 = vpack.c.b16 %v114, %v113
    %v130 = vpack.c.b16 %v116, %v115
    %v131 = vpack.c.b16 %v118, %v117
    %v132 = vpack.c.b16 %v120, %v119
    %v133 = vpack.c.b16 %v122, %v121
    %v134 = vpack.c.b16 %v124, %v123
    %v135 = vpack.c.b16 %v126, %v125
    %v136 = vpack.c.b16 %v128, %v127
    %145 = vmatpush.bf16.msra.mxu0 %v136
    %146 = vmatpush.bf16.msra.mxu0 %v135
    %147 = vmatpush.bf16.msra.mxu0 %v134
    %148 = vmatpush.bf16.msra.mxu0 %v133
    %149 = vmatpush.bf16.msra.mxu0 %v132
    %150 = vmatpush.bf16.msra.mxu0 %v131
    %151 = vmatpush.bf16.msra.mxu0 %v130
    %152 = vmatpush.bf16.msra.mxu0 %v129
    %153 = vmatmul.bf16.gmra.mxu0 %v92
    %v154 = vpop.f32.mrf.mxu0
    %v155 = vadd.f32 %v95, %v154
    %v156 = vpop.f32.mrf.mxu0
    %157 = vdwg.mxu0
    %v158 = vmax.f32 %v155, 0.0
    %v159 = vld [vmem:[#allocation5] sm:$0xf]
    %v160 = vld [vmem:[#allocation5 + $0x4] sm:$0xf]
    %v161 = vld [vmem:[#allocation5 + $0x8] sm:$0xf]
    %v162 = vld [vmem:[#allocation5 + $0xc] sm:$0xf]
    %v163 = vld [vmem:[#allocation5 + $0x10] sm:$0xf]
    %v164 = vld [vmem:[#allocation5 + $0x14] sm:$0xf]
    %v165 = vld [vmem:[#allocation5 + $0x18] sm:$0xf]
    %v166 = vld [vmem:[#allocation5 + $0x1c] sm:$0xf]
    %v167 = vld [vmem:[#allocation5 + $0x20] sm:$0xf]
    %v168 = vld [vmem:[#allocation5 + $0x24] sm:$0xf]
    %v169 = vld [vmem:[#allocation5 + $0x28] sm:$0xf]
    %v170 = vld [vmem:[#allocation5 + $0x2c] sm:$0xf]
    %v171 = vld [vmem:[#allocation5 + $0x30] sm:$0xf]
    %v172 = vld [vmem:[#allocation5 + $0x34] sm:$0xf]
    %v173 = vld [vmem:[#allocation5 + $0x38] sm:$0xf]
    %v174 = vld [vmem:[#allocation5 + $0x3c] sm:$0xf]
    %v175 = vpack.c.bf16 %v158, %v158
    %v176 = vld [vmem:[%s6] sm:$0x1]
    %v178 = vperm.slane %v176, 0
    %v196 = vunpack.c.l.b16 %v159
    %v197 = vunpack.c.l.b16 %v160
    %v198 = vunpack.c.l.b16 %v161
    %v199 = vunpack.c.l.b16 %v162
    %v200 = vunpack.c.l.b16 %v163
    %v201 = vunpack.c.l.b16 %v164
    %v202 = vunpack.c.l.b16 %v165
    %v203 = vunpack.c.l.b16 %v166
    %v204 = vunpack.c.l.b16 %v167
    %v205 = vunpack.c.l.b16 %v168
    %v206 = vunpack.c.l.b16 %v169
    %v207 = vunpack.c.l.b16 %v170
    %v208 = vunpack.c.l.b16 %v171
    %v209 = vunpack.c.l.b16 %v172
    %v210 = vunpack.c.l.b16 %v173
    %v211 = vunpack.c.l.b16 %v174
    %v212 = vpack.c.b16 %v197, %v196
    %v213 = vpack.c.b16 %v199, %v198
    %v214 = vpack.c.b16 %v201, %v200
    %v215 = vpack.c.b16 %v203, %v202
    %v216 = vpack.c.b16 %v205, %v204
    %v217 = vpack.c.b16 %v207, %v206
    %v218 = vpack.c.b16 %v209, %v208
    %v219 = vpack.c.b16 %v211, %v210
    %228 = vmatpush.bf16.msra.mxu0 %v219
    %229 = vmatpush.bf16.msra.mxu0 %v218
    %230 = vmatpush.bf16.msra.mxu0 %v217
    %231 = vmatpush.bf16.msra.mxu0 %v216
    %232 = vmatpush.bf16.msra.mxu0 %v215
    %233 = vmatpush.bf16.msra.mxu0 %v214
    %234 = vmatpush.bf16.msra.mxu0 %v213
    %235 = vmatpush.bf16.msra.mxu0 %v212
    %236 = vmatmul.bf16.gmra.mxu0 %v175
    %v237 = vpop.f32.mrf.mxu0
    %v238 = vadd.f32 %v178, %v237
    %v239 = vpop.f32.mrf.mxu0
    %240 = vdwg.mxu0
    %v241 = vsub.f32 0.0, %v238
    %v242 = vmul.f32 %v241, 1.442695
    %v243 = vpow.pop %v242
    %v244 = vadd.f32 %v243, 1.0
    %v245 = vrcp.pop %v244
    %246 = vst [vmem:[#allocation7] sm:$0xff] %v245
    // Predicated region
    $region38: #{tpu_custom_call.1} parent=1 // pred_check
      _
    $region39: #{tpu_custom_call.1} parent=1 // pred_check_branch
      %248 = sbr.rel (0) target = $region41
    $region40: #{tpu_custom_call.1} parent=1 // pred_region
      %250 = vsyncadd [#allocation4], 0
      %s252 = sshll.u32 [#allocation7], 4
      %s253 = int_to_ptr.vmem [resolvable:$true] %s252
      %s254 = sshll.u32 %s7, 4
      %s255 = int_to_ptr.hbm [resolvable:$true] %s254
      %257 = dma.vmem_to_hbm [thread:$0]  %s253, 128, %s255, [#allocation4]
    $region41: #{tpu_custom_call.1} parent=1 // pred_fallthru
      _
    // Predicated region
    $region42: #{tpu_custom_call.1} parent=1 // pred_check
      _
    $region43: #{tpu_custom_call.1} parent=1 // pred_check_branch
      %259 = sbr.rel (0) target = $region45
    $region44: #{tpu_custom_call.1} parent=1 // pred_region
      %261 = dma.done [#allocation4], 128
    $region45: #{tpu_custom_call.1} parent=1 // pred_fallthru
      _
    %262 = vsyncpa [#allocation3], 1
    %263 = vsyncpa [#allocation6], 1
    %264 = vsyncpa [#allocation4], 1

</llo_original>
